<compile_context>
chip_gen: v7x
topology: tpu7x:2x2x1
jax: 0.10.0
libtpu: 0.0.40
codegen_flags: <defaults>
</compile_context>

<pallas_src>
import jax
import jax.numpy as jnp
from jax.experimental import pallas as pl
from jax.experimental.pallas import tpu as pltpu

H_DIM = 3
META_LATENT_DIM = 4
N_PARAMS = 64
SYSTEM_DIM = 180

IN_REAL = H_DIM + META_LATENT_DIM          # 7  ([h | z] concat)
IN_PAD = 8                                 # padded fused-input width
N_PAD = 128                                # padded hidden width (64 -> 128)
OUT_REAL = 2 * SYSTEM_DIM                  # 360
OUT_PAD = 384                              # lane-dense output width (multiple of 128)


def _round_up(x, m):
    return ((x + m - 1) // m) * m


def _generator_kernel(
    x_ref,                     # (TILE_B, IN_PAD)  fused [h | z | 0] input tile
    w_in, b_in,                # (IN_PAD, 2*N_PAD), (1, 2*N_PAD)   block-diag fch0/fcz
    w_fch1, b_fch1,            # (N_PAD, N_PAD), (1, N_PAD)
    w_l0, b_l0,
    w_l1, b_l1,
    w_l2, b_l2,
    w_out, b_out,              # (N_PAD, OUT_PAD), (1, OUT_PAD)
    out_ref,                   # (TILE_B, OUT_PAD)
):
    relu = lambda t: jnp.maximum(t, 0.0)

    def linear(t, w_r, b_r):
        return jnp.dot(t, w_r[...], preferred_element_type=jnp.float32) + b_r[...]

    # Fused first layer: one matmul produces [relu(fch0(h)) | relu(fcz(z))],
    # each half padded to 128 lanes (pad lanes are exactly zero).
    hz = relu(linear(x_ref[...], w_in, b_in))      # (TILE_B, 2*N_PAD)
    h = hz[:, :N_PAD]                              # (TILE_B, N_PAD)
    z = hz[:, N_PAD:]                              # (TILE_B, N_PAD)

    h = relu(linear(h, w_fch1, b_fch1))
    x = z + h

    x = relu(linear(x, w_l0, b_l0))
    x = relu(linear(x, w_l1, b_l1))
    x = relu(linear(x, w_l2, b_l2))
    s = linear(x, w_out, b_out)                    # (TILE_B, OUT_PAD)

    out_ref[...] = s.astype(out_ref.dtype)


def init_params(key):
    """Deterministic parameter init mimicking PyTorch nn.Linear defaults
    (uniform(-1/sqrt(fan_in), 1/sqrt(fan_in))). Weights stored as
    (in_features, out_features) so forward is x @ W + b."""
    dims = [
        ("fch0", H_DIM, N_PARAMS),
        ("fch1", N_PARAMS, N_PARAMS),
        ("fcz", META_LATENT_DIM, N_PARAMS),
        ("l0", N_PARAMS, N_PARAMS),
        ("l1", N_PARAMS, N_PARAMS),
        ("l2", N_PARAMS, N_PARAMS),
        ("out", N_PARAMS, 2 * SYSTEM_DIM),
    ]
    params = {}
    for name, fan_in, fan_out in dims:
        key, kw, kb = jax.random.split(key, 3)
        bound = 1.0 / (fan_in ** 0.5)
        w = jax.random.uniform(kw, (fan_in, fan_out), jnp.float32, -bound, bound)
        b = jax.random.uniform(kb, (1, fan_out), jnp.float32, -bound, bound)
        params[name] = (w, b)
    return params


def _pad_params_for_kernel(params):
    """Build the padded / fused parameter tensors the kernel consumes.
    All pad rows/columns are zero, so padded lanes stay exactly zero through
    every ReLU layer and the final padded output columns are zero."""
    w_fch0, b_fch0 = params["fch0"]
    w_fcz, b_fcz = params["fcz"]

    # Fused block-diagonal first layer: [h | z | pad] (IN_PAD wide) -> [h128 | z128].
    w_in = jnp.zeros((IN_PAD, 2 * N_PAD), jnp.float32)
    w_in = w_in.at[0:H_DIM, 0:N_PARAMS].set(w_fch0)
    w_in = w_in.at[H_DIM:H_DIM + META_LATENT_DIM, N_PAD:N_PAD + N_PARAMS].set(w_fcz)
    b_in = jnp.zeros((1, 2 * N_PAD), jnp.float32)
    b_in = b_in.at[:, 0:N_PARAMS].set(b_fch0)
    b_in = b_in.at[:, N_PAD:N_PAD + N_PARAMS].set(b_fcz)

    def pad_square(name):
        w, b = params[name]
        wp = jnp.zeros((N_PAD, N_PAD), jnp.float32).at[:N_PARAMS, :N_PARAMS].set(w)
        bp = jnp.zeros((1, N_PAD), jnp.float32).at[:, :N_PARAMS].set(b)
        return wp, bp

    w_fch1, b_fch1 = pad_square("fch1")
    w_l0, b_l0 = pad_square("l0")
    w_l1, b_l1 = pad_square("l1")
    w_l2, b_l2 = pad_square("l2")

    w_out_l, b_out_l = params["out"]
    w_out = jnp.zeros((N_PAD, OUT_PAD), jnp.float32).at[:N_PARAMS, :OUT_REAL].set(w_out_l)
    b_out = jnp.zeros((1, OUT_PAD), jnp.float32).at[:, :OUT_REAL].set(b_out_l)

    return [w_in, b_in, w_fch1, b_fch1, w_l0, b_l0,
            w_l1, b_l1, w_l2, b_l2, w_out, b_out]


def vanilla_generator_forward(z, h, params):
    """z: (B, meta_latent_dim) float32, h: (B, h_dim) float32.
    Returns s: (B, 2, system_dim) float32."""
    B = z.shape[0]

    # Batch tile: multiple of 8 sublanes, capped at 1024 rows (fits easily in
    # VMEM even on v7x's 64 MiB: out tile 1024x384xf32 = 1.5 MiB per buffer).
    tile_b = min(1024, _round_up(B, 8))
    b_pad = _round_up(B, tile_b)

    # Fused, padded input [h | z | 0]  -> (B_pad, IN_PAD)
    x = jnp.concatenate([h, z], axis=1)                       # (B, 7)
    x = jnp.pad(x, ((0, b_pad - B), (0, IN_PAD - IN_REAL)))   # (B_pad, 8)

    kernel_params = _pad_params_for_kernel(params)

    in_specs = [pl.BlockSpec((tile_b, IN_PAD), lambda i: (i, 0))]
    in_specs += [pl.BlockSpec(p.shape, lambda i: (0, 0)) for p in kernel_params]
    out_spec = pl.BlockSpec((tile_b, OUT_PAD), lambda i: (i, 0))

    s_pad = pl.pallas_call(
        _generator_kernel,
        out_shape=jax.ShapeDtypeStruct((b_pad, OUT_PAD), jnp.float32),
        grid=(b_pad // tile_b,),
        in_specs=in_specs,
        out_specs=out_spec,
        compiler_params=pltpu.CompilerParams(
            dimension_semantics=("parallel",),
            vmem_limit_bytes=32 * 1024 * 1024,
        ),
    )(x, *kernel_params)

    s = s_pad[:B, :OUT_REAL]
    return jnp.reshape(s, (-1, 2, SYSTEM_DIM))


def _reference_forward(z, h, params):
    relu = lambda x: jnp.maximum(x, 0.0)
    lin = lambda x, p: x @ p[0] + p[1]
    hh = relu(lin(h, params["fch0"]))
    hh = relu(lin(hh, params["fch1"]))
    zz = relu(lin(z, params["fcz"]))
    x = zz + hh
    x = relu(lin(x, params["l0"]))
    x = relu(lin(x, params["l1"]))
    x = relu(lin(x, params["l2"]))
    s = lin(x, params["out"])
    return jnp.reshape(s, (-1, 2, SYSTEM_DIM))


if __name__ == "__main__":
    key = jax.random.PRNGKey(0)
    kp, kz, kh = jax.random.split(key, 3)

    batch = 2
    params = init_params(kp)
    z = jax.random.normal(kz, (batch, META_LATENT_DIM), jnp.float32)
    h = jax.random.normal(kh, (batch, H_DIM), jnp.float32)

    out = vanilla_generator_forward(z, h, params)
    out = jax.block_until_ready(out)

    ref = _reference_forward(z, h, params)
    assert out.shape == (batch, 2, SYSTEM_DIM), out.shape
    assert jnp.allclose(out, ref, atol=1e-4, rtol=1e-4), "mismatch vs reference"

    print("KERNEL_OK")
</pallas_src>

<mosaic_0001>
module attributes {stable_mosaic.version = 11 : i64} {
  func.func @_generator_kernel(%arg0: i32, %arg1: memref<8x8xf32, #tpu.memory_space<vmem>>, %arg2: memref<8x256xf32, #tpu.memory_space<vmem>>, %arg3: memref<1x256xf32, #tpu.memory_space<vmem>>, %arg4: memref<128x128xf32, #tpu.memory_space<vmem>>, %arg5: memref<1x128xf32, #tpu.memory_space<vmem>>, %arg6: memref<128x128xf32, #tpu.memory_space<vmem>>, %arg7: memref<1x128xf32, #tpu.memory_space<vmem>>, %arg8: memref<128x128xf32, #tpu.memory_space<vmem>>, %arg9: memref<1x128xf32, #tpu.memory_space<vmem>>, %arg10: memref<128x128xf32, #tpu.memory_space<vmem>>, %arg11: memref<1x128xf32, #tpu.memory_space<vmem>>, %arg12: memref<128x384xf32, #tpu.memory_space<vmem>>, %arg13: memref<1x384xf32, #tpu.memory_space<vmem>>, %arg14: memref<8x384xf32, #tpu.memory_space<vmem>>) attributes {dimension_semantics = [#tpu.dimension_semantics<parallel>], iteration_bounds = array<i64: 1>, scalar_prefetch = 0 : i64, scratch_operands = 0 : i64, tpu.core_type = #tpu.core_type<tc>, window_params = [{transform_indices = @transform_0, window_bounds = array<i64: 8, 8>}, {pipeline_mode = #tpu.pipeline_mode<synchronous>, transform_indices = @transform_1, window_bounds = array<i64: 8, 256>}, {pipeline_mode = #tpu.pipeline_mode<synchronous>, transform_indices = @transform_2, window_bounds = array<i64: 1, 256>}, {pipeline_mode = #tpu.pipeline_mode<synchronous>, transform_indices = @transform_3, window_bounds = array<i64: 128, 128>}, {pipeline_mode = #tpu.pipeline_mode<synchronous>, transform_indices = @transform_4, window_bounds = array<i64: 1, 128>}, {pipeline_mode = #tpu.pipeline_mode<synchronous>, transform_indices = @transform_5, window_bounds = array<i64: 128, 128>}, {pipeline_mode = #tpu.pipeline_mode<synchronous>, transform_indices = @transform_6, window_bounds = array<i64: 1, 128>}, {pipeline_mode = #tpu.pipeline_mode<synchronous>, transform_indices = @transform_7, window_bounds = array<i64: 128, 128>}, {pipeline_mode = #tpu.pipeline_mode<synchronous>, transform_indices = @transform_8, window_bounds = array<i64: 1, 128>}, {pipeline_mode = #tpu.pipeline_mode<synchronous>, transform_indices = @transform_9, window_bounds = array<i64: 128, 128>}, {pipeline_mode = #tpu.pipeline_mode<synchronous>, transform_indices = @transform_10, window_bounds = array<i64: 1, 128>}, {pipeline_mode = #tpu.pipeline_mode<synchronous>, transform_indices = @transform_11, window_bounds = array<i64: 128, 384>}, {pipeline_mode = #tpu.pipeline_mode<synchronous>, transform_indices = @transform_12, window_bounds = array<i64: 1, 384>}, {transform_indices = @transform_13, window_bounds = array<i64: 8, 384>}]} {
    %c0 = arith.constant 0 : index
    %c0_0 = arith.constant 0 : index
    %0 = vector.load %arg1[%c0, %c0_0] : memref<8x8xf32, #tpu.memory_space<vmem>>, vector<8x8xf32>
    %c0_1 = arith.constant 0 : index
    %c0_2 = arith.constant 0 : index
    %1 = vector.load %arg2[%c0_1, %c0_2] : memref<8x256xf32, #tpu.memory_space<vmem>>, vector<8x256xf32>
    %cst = arith.constant dense<0.000000e+00> : vector<8x256xf32>
    %2 = tpu.matmul %0, %1, %cst {dimension_numbers = #tpu.dot_dimension_numbers<[1], [0], [0], [1], [0, 0, 1, 1], [], []>} : vector<8x8xf32>, vector<8x256xf32>, vector<8x256xf32> -> vector<8x256xf32>
    %c0_3 = arith.constant 0 : index
    %c0_4 = arith.constant 0 : index
    %3 = vector.load %arg3[%c0_3, %c0_4] : memref<1x256xf32, #tpu.memory_space<vmem>>, vector<1x256xf32>
    %4 = vector.broadcast %3 : vector<1x256xf32> to vector<8x256xf32>
    %5 = arith.addf %2, %4 : vector<8x256xf32>
    %cst_5 = arith.constant 0.000000e+00 : f32
    %6 = vector.broadcast %cst_5 : f32 to vector<8x256xf32>
    %7 = arith.maximumf %5, %6 : vector<8x256xf32>
    %8 = vector.extract_strided_slice %7 {offsets = [0, 0], sizes = [8, 128], strides = [1, 1]} : vector<8x256xf32> to vector<8x128xf32>
    %9 = vector.extract_strided_slice %7 {offsets = [0, 128], sizes = [8, 128], strides = [1, 1]} : vector<8x256xf32> to vector<8x128xf32>
    %c0_6 = arith.constant 0 : index
    %c0_7 = arith.constant 0 : index
    %10 = vector.load %arg4[%c0_6, %c0_7] : memref<128x128xf32, #tpu.memory_space<vmem>>, vector<128x128xf32>
    %cst_8 = arith.constant dense<0.000000e+00> : vector<8x128xf32>
    %11 = tpu.matmul %8, %10, %cst_8 {dimension_numbers = #tpu.dot_dimension_numbers<[1], [0], [0], [1], [0, 0, 1, 1], [], []>} : vector<8x128xf32>, vector<128x128xf32>, vector<8x128xf32> -> vector<8x128xf32>
    %c0_9 = arith.constant 0 : index
    %c0_10 = arith.constant 0 : index
    %12 = vector.load %arg5[%c0_9, %c0_10] : memref<1x128xf32, #tpu.memory_space<vmem>>, vector<1x128xf32>
    %13 = vector.broadcast %12 : vector<1x128xf32> to vector<8x128xf32>
    %14 = arith.addf %11, %13 : vector<8x128xf32>
    %cst_11 = arith.constant 0.000000e+00 : f32
    %15 = vector.broadcast %cst_11 : f32 to vector<8x128xf32>
    %16 = arith.maximumf %14, %15 : vector<8x128xf32>
    %17 = arith.addf %9, %16 : vector<8x128xf32>
    %c0_12 = arith.constant 0 : index
    %c0_13 = arith.constant 0 : index
    %18 = vector.load %arg6[%c0_12, %c0_13] : memref<128x128xf32, #tpu.memory_space<vmem>>, vector<128x128xf32>
    %cst_14 = arith.constant dense<0.000000e+00> : vector<8x128xf32>
    %19 = tpu.matmul %17, %18, %cst_14 {dimension_numbers = #tpu.dot_dimension_numbers<[1], [0], [0], [1], [0, 0, 1, 1], [], []>} : vector<8x128xf32>, vector<128x128xf32>, vector<8x128xf32> -> vector<8x128xf32>
    %c0_15 = arith.constant 0 : index
    %c0_16 = arith.constant 0 : index
    %20 = vector.load %arg7[%c0_15, %c0_16] : memref<1x128xf32, #tpu.memory_space<vmem>>, vector<1x128xf32>
    %21 = vector.broadcast %20 : vector<1x128xf32> to vector<8x128xf32>
    %22 = arith.addf %19, %21 : vector<8x128xf32>
    %cst_17 = arith.constant 0.000000e+00 : f32
    %23 = vector.broadcast %cst_17 : f32 to vector<8x128xf32>
    %24 = arith.maximumf %22, %23 : vector<8x128xf32>
    %c0_18 = arith.constant 0 : index
    %c0_19 = arith.constant 0 : index
    %25 = vector.load %arg8[%c0_18, %c0_19] : memref<128x128xf32, #tpu.memory_space<vmem>>, vector<128x128xf32>
    %cst_20 = arith.constant dense<0.000000e+00> : vector<8x128xf32>
    %26 = tpu.matmul %24, %25, %cst_20 {dimension_numbers = #tpu.dot_dimension_numbers<[1], [0], [0], [1], [0, 0, 1, 1], [], []>} : vector<8x128xf32>, vector<128x128xf32>, vector<8x128xf32> -> vector<8x128xf32>
    %c0_21 = arith.constant 0 : index
    %c0_22 = arith.constant 0 : index
    %27 = vector.load %arg9[%c0_21, %c0_22] : memref<1x128xf32, #tpu.memory_space<vmem>>, vector<1x128xf32>
    %28 = vector.broadcast %27 : vector<1x128xf32> to vector<8x128xf32>
    %29 = arith.addf %26, %28 : vector<8x128xf32>
    %cst_23 = arith.constant 0.000000e+00 : f32
    %30 = vector.broadcast %cst_23 : f32 to vector<8x128xf32>
    %31 = arith.maximumf %29, %30 : vector<8x128xf32>
    %c0_24 = arith.constant 0 : index
    %c0_25 = arith.constant 0 : index
    %32 = vector.load %arg10[%c0_24, %c0_25] : memref<128x128xf32, #tpu.memory_space<vmem>>, vector<128x128xf32>
    %cst_26 = arith.constant dense<0.000000e+00> : vector<8x128xf32>
    %33 = tpu.matmul %31, %32, %cst_26 {dimension_numbers = #tpu.dot_dimension_numbers<[1], [0], [0], [1], [0, 0, 1, 1], [], []>} : vector<8x128xf32>, vector<128x128xf32>, vector<8x128xf32> -> vector<8x128xf32>
    %c0_27 = arith.constant 0 : index
    %c0_28 = arith.constant 0 : index
    %34 = vector.load %arg11[%c0_27, %c0_28] : memref<1x128xf32, #tpu.memory_space<vmem>>, vector<1x128xf32>
    %35 = vector.broadcast %34 : vector<1x128xf32> to vector<8x128xf32>
    %36 = arith.addf %33, %35 : vector<8x128xf32>
    %cst_29 = arith.constant 0.000000e+00 : f32
    %37 = vector.broadcast %cst_29 : f32 to vector<8x128xf32>
    %38 = arith.maximumf %36, %37 : vector<8x128xf32>
    %c0_30 = arith.constant 0 : index
    %c0_31 = arith.constant 0 : index
    %39 = vector.load %arg12[%c0_30, %c0_31] : memref<128x384xf32, #tpu.memory_space<vmem>>, vector<128x384xf32>
    %cst_32 = arith.constant dense<0.000000e+00> : vector<8x384xf32>
    %40 = tpu.matmul %38, %39, %cst_32 {dimension_numbers = #tpu.dot_dimension_numbers<[1], [0], [0], [1], [0, 0, 1, 1], [], []>} : vector<8x128xf32>, vector<128x384xf32>, vector<8x384xf32> -> vector<8x384xf32>
    %c0_33 = arith.constant 0 : index
    %c0_34 = arith.constant 0 : index
    %41 = vector.load %arg13[%c0_33, %c0_34] : memref<1x384xf32, #tpu.memory_space<vmem>>, vector<1x384xf32>
    %42 = vector.broadcast %41 : vector<1x384xf32> to vector<8x384xf32>
    %43 = arith.addf %40, %42 : vector<8x384xf32>
    %c0_35 = arith.constant 0 : index
    %c0_36 = arith.constant 0 : index
    %44 = vector.load %arg14[%c0_35, %c0_36] : memref<8x384xf32, #tpu.memory_space<vmem>>, vector<8x384xf32>
    tpu.vector_store %arg14[%c0_35, %c0_36], %43 {strides = array<i32>} : memref<8x384xf32, #tpu.memory_space<vmem>>, vector<8x384xf32>,
    return
  }
  func.func @transform_0(%arg0: i32) -> (i32, i32) {
    %c0_i32 = arith.constant 0 : i32
    %c0_i32_0 = arith.constant 0 : i32
    return %arg0, %c0_i32 : i32, i32
  }
  func.func @transform_1(%arg0: i32) -> (i32, i32) {
    %c0_i32 = arith.constant 0 : i32
    %c0_i32_0 = arith.constant 0 : i32
    %c0_i32_1 = arith.constant 0 : i32
    return %c0_i32, %c0_i32_0 : i32, i32
  }
  func.func @transform_2(%arg0: i32) -> (i32, i32) {
    %c0_i32 = arith.constant 0 : i32
    %c0_i32_0 = arith.constant 0 : i32
    %c0_i32_1 = arith.constant 0 : i32
    return %c0_i32, %c0_i32_0 : i32, i32
  }
  func.func @transform_3(%arg0: i32) -> (i32, i32) {
    %c0_i32 = arith.constant 0 : i32
    %c0_i32_0 = arith.constant 0 : i32
    %c0_i32_1 = arith.constant 0 : i32
    return %c0_i32, %c0_i32_0 : i32, i32
  }
  func.func @transform_4(%arg0: i32) -> (i32, i32) {
    %c0_i32 = arith.constant 0 : i32
    %c0_i32_0 = arith.constant 0 : i32
    %c0_i32_1 = arith.constant 0 : i32
    return %c0_i32, %c0_i32_0 : i32, i32
  }
  func.func @transform_5(%arg0: i32) -> (i32, i32) {
    %c0_i32 = arith.constant 0 : i32
    %c0_i32_0 = arith.constant 0 : i32
    %c0_i32_1 = arith.constant 0 : i32
    return %c0_i32, %c0_i32_0 : i32, i32
  }
  func.func @transform_6(%arg0: i32) -> (i32, i32) {
    %c0_i32 = arith.constant 0 : i32
    %c0_i32_0 = arith.constant 0 : i32
    %c0_i32_1 = arith.constant 0 : i32
    return %c0_i32, %c0_i32_0 : i32, i32
  }
  func.func @transform_7(%arg0: i32) -> (i32, i32) {
    %c0_i32 = arith.constant 0 : i32
    %c0_i32_0 = arith.constant 0 : i32
    %c0_i32_1 = arith.constant 0 : i32
    return %c0_i32, %c0_i32_0 : i32, i32
  }
  func.func @transform_8(%arg0: i32) -> (i32, i32) {
    %c0_i32 = arith.constant 0 : i32
    %c0_i32_0 = arith.constant 0 : i32
    %c0_i32_1 = arith.constant 0 : i32
    return %c0_i32, %c0_i32_0 : i32, i32
  }
  func.func @transform_9(%arg0: i32) -> (i32, i32) {
    %c0_i32 = arith.constant 0 : i32
    %c0_i32_0 = arith.constant 0 : i32
    %c0_i32_1 = arith.constant 0 : i32
    return %c0_i32, %c0_i32_0 : i32, i32
  }
  func.func @transform_10(%arg0: i32) -> (i32, i32) {
    %c0_i32 = arith.constant 0 : i32
    %c0_i32_0 = arith.constant 0 : i32
    %c0_i32_1 = arith.constant 0 : i32
    return %c0_i32, %c0_i32_0 : i32, i32
  }
  func.func @transform_11(%arg0: i32) -> (i32, i32) {
    %c0_i32 = arith.constant 0 : i32
    %c0_i32_0 = arith.constant 0 : i32
    %c0_i32_1 = arith.constant 0 : i32
    return %c0_i32, %c0_i32_0 : i32, i32
  }
  func.func @transform_12(%arg0: i32) -> (i32, i32) {
    %c0_i32 = arith.constant 0 : i32
    %c0_i32_0 = arith.constant 0 : i32
    %c0_i32_1 = arith.constant 0 : i32
    return %c0_i32, %c0_i32_0 : i32, i32
  }
  func.func @transform_13(%arg0: i32) -> (i32, i32) {
    %c0_i32 = arith.constant 0 : i32
    %c0_i32_0 = arith.constant 0 : i32
    return %arg0, %c0_i32 : i32, i32
  }
}

</mosaic_0001>

<llo_original>
// kernel: tpu_custom_call.1
$region0: #{tpu_custom_call.1}
  #allocation0 [shape = 'u32[]', space=smem, size = 0x4, offset = 0x4, fixed_abs, tag = 'smem constant byte address 0x4 - core index']
  #allocation1 [shape = 'u32[144,128]{1,0:T(1,128)}', space=vmem, size = 0x12000, scoped, tag = 'internal scratch']
  %s0 = inlined_call_operand.hbm [shape: f32[8,8], index: 0, kind: input, shape index: {}]
  %s1 = inlined_call_operand.hbm [shape: f32[8,256], index: 1, kind: input, shape index: {}]
  %s2 = inlined_call_operand.vmem [shape: f32[1,256], index: 2, kind: input, shape index: {}]
  %s3 = inlined_call_operand.hbm [shape: f32[128,128], index: 3, kind: input, shape index: {}]
  %s4 = inlined_call_operand.vmem [shape: f32[1,128], index: 4, kind: input, shape index: {}]
  %s5 = inlined_call_operand.hbm [shape: f32[128,128], index: 5, kind: input, shape index: {}]
  %s6 = inlined_call_operand.vmem [shape: f32[1,128], index: 6, kind: input, shape index: {}]
  %s7 = inlined_call_operand.hbm [shape: f32[128,128], index: 7, kind: input, shape index: {}]
  %s8 = inlined_call_operand.vmem [shape: f32[1,128], index: 8, kind: input, shape index: {}]
  %s9 = inlined_call_operand.hbm [shape: f32[128,128], index: 9, kind: input, shape index: {}]
  %s10 = inlined_call_operand.vmem [shape: f32[1,128], index: 10, kind: input, shape index: {}]
  %s11 = inlined_call_operand.hbm [shape: f32[128,384], index: 11, kind: input, shape index: {}]
  %s12 = inlined_call_operand.vmem [shape: f32[1,384], index: 12, kind: input, shape index: {}]
  %s13 = inlined_call_operand.hbm [shape: f32[8,384], index: 13, kind: output, shape index: {}]
  %s14 = sld [smem:[#allocation0]]
  $region90: #{tpu_custom_call.1} parent=0
    _
  %s16 = ssub.s32 1, %s14
  %s17 = scalar_select 0, %s16, %s14
  $region1: #{tpu_custom_call.1} parent=0
    #allocation2 [shape = 'u8[4096]{0}', space=vmem, size = 0x1000, scoped, tag = 'input window, operand 0, single buffered']
    #allocation3 [shape = 's32[1]{0}', space=sflag, size = 0x4, scoped, tag = 'scoped memory for tpu_custom_call.1']
    #allocation4 [shape = 's32[1]{0}', space=sflag, size = 0x4, scoped, tag = 'scoped memory for tpu_custom_call.1']
    #allocation5 [shape = 'u8[8192]{0}', space=vmem, size = 0x2000, scoped, tag = 'input window, operand 1, single buffered']
    #allocation6 [shape = 's32[1]{0}', space=sflag, size = 0x4, scoped, tag = 'scoped memory for tpu_custom_call.1']
    #allocation7 [shape = 'u8[65536]{0}', space=vmem, size = 0x10000, scoped, tag = 'input window, operand 3, single buffered']
    #allocation8 [shape = 'u8[65536]{0}', space=vmem, size = 0x10000, scoped, tag = 'input window, operand 5, single buffered']
    #allocation9 [shape = 's32[1]{0}', space=sflag, size = 0x4, scoped, tag = 'scoped memory for tpu_custom_call.1']
    #allocation10 [shape = 'u8[65536]{0}', space=vmem, size = 0x10000, scoped, tag = 'input window, operand 7, single buffered']
    #allocation11 [shape = 'u8[65536]{0}', space=vmem, size = 0x10000, scoped, tag = 'input window, operand 9, single buffered']
    #allocation12 [shape = 's32[1]{0}', space=sflag, size = 0x4, scoped, tag = 'scoped memory for tpu_custom_call.1']
    #allocation13 [shape = 'u8[196608]{0}', space=vmem, size = 0x30000, scoped, tag = 'input window, operand 11, single buffered']
    #allocation14 [shape = 'u8[12288]{0}', space=vmem, size = 0x3000, scoped, tag = 'output window, operand 0, single buffered']
    %18 = vsyncpa [#allocation3], 0
    %19 = vsyncpa [#allocation6], 0
    %20 = vsyncpa [#allocation9], 0
    %21 = vsyncpa [#allocation12], 0
    %22 = vsyncpa [#allocation4], 0
    // Predicated region
    $region2: #{tpu_custom_call.1} parent=1 // pred_check
      _
    $region3: #{tpu_custom_call.1} parent=1 // pred_check_branch
      %24 = sbr.rel (0) target = $region5
    $region4: #{tpu_custom_call.1} parent=1 // pred_region
      %s26 = ssub.s32 128, 128
      %27 = vsyncadd [#allocation3], %s26
      %s29 = sshll.u32 [#allocation2], 4
      %s30 = int_to_ptr.vmem [resolvable:$true] %s29
      %32 = dma.hbm_to_vmem [thread:$0]  %s0, 128, %s30, [#allocation3]
    $region5: #{tpu_custom_call.1} parent=1 // pred_fallthru
      _
    // Predicated region
    $region6: #{tpu_custom_call.1} parent=1 // pred_check
      _
    $region7: #{tpu_custom_call.1} parent=1 // pred_check_branch
      %34 = sbr.rel (0) target = $region9
    $region8: #{tpu_custom_call.1} parent=1 // pred_region
      %s36 = ssub.s32 256, 256
      %37 = vsyncadd [#allocation6], %s36
      %s39 = sshll.u32 [#allocation5], 4
      %s40 = int_to_ptr.vmem [resolvable:$true] %s39
      %42 = dma.hbm_to_vmem [thread:$0]  %s1, 256, %s40, [#allocation6]
    $region9: #{tpu_custom_call.1} parent=1 // pred_fallthru
      _
    // Predicated region
    $region10: #{tpu_custom_call.1} parent=1 // pred_check
      _
    $region11: #{tpu_custom_call.1} parent=1 // pred_check_branch
      %44 = sbr.rel (0) target = $region13
    $region12: #{tpu_custom_call.1} parent=1 // pred_region
      _
    $region13: #{tpu_custom_call.1} parent=1 // pred_fallthru
      _
    // Predicated region
    $region14: #{tpu_custom_call.1} parent=1 // pred_check
      _
    $region15: #{tpu_custom_call.1} parent=1 // pred_check_branch
      %46 = sbr.rel (0) target = $region17
    $region16: #{tpu_custom_call.1} parent=1 // pred_region
      %s48 = ssub.s32 2048, 2048
      %49 = vsyncadd [#allocation6], %s48
      %s50 = sshll.u32 [#allocation7], 4
      %s51 = int_to_ptr.vmem [resolvable:$true] %s50
      %56 = dma.hbm_to_vmem [thread:$0]  %s3, 2048, %s51, [#allocation6], 128, 128, 8
    $region17: #{tpu_custom_call.1} parent=1 // pred_fallthru
      _
    // Predicated region
    $region18: #{tpu_custom_call.1} parent=1 // pred_check
      _
    $region19: #{tpu_custom_call.1} parent=1 // pred_check_branch
      %58 = sbr.rel (0) target = $region21
    $region20: #{tpu_custom_call.1} parent=1 // pred_region
      _
    $region21: #{tpu_custom_call.1} parent=1 // pred_fallthru
      _
    // Predicated region
    $region22: #{tpu_custom_call.1} parent=1 // pred_check
      _
    $region23: #{tpu_custom_call.1} parent=1 // pred_check_branch
      %60 = sbr.rel (0) target = $region25
    $region24: #{tpu_custom_call.1} parent=1 // pred_region
      %s62 = ssub.s32 2048, 2048
      %63 = vsyncadd [#allocation9], %s62
      %s64 = sshll.u32 [#allocation8], 4
      %s65 = int_to_ptr.vmem [resolvable:$true] %s64
      %70 = dma.hbm_to_vmem [thread:$0]  %s5, 2048, %s65, [#allocation9], 128, 128, 8
    $region25: #{tpu_custom_call.1} parent=1 // pred_fallthru
      _
    // Predicated region
    $region26: #{tpu_custom_call.1} parent=1 // pred_check
      _
    $region27: #{tpu_custom_call.1} parent=1 // pred_check_branch
      %72 = sbr.rel (0) target = $region29
    $region28: #{tpu_custom_call.1} parent=1 // pred_region
      _
    $region29: #{tpu_custom_call.1} parent=1 // pred_fallthru
      _
    // Predicated region
    $region30: #{tpu_custom_call.1} parent=1 // pred_check
      _
    $region31: #{tpu_custom_call.1} parent=1 // pred_check_branch
      %74 = sbr.rel (0) target = $region33
    $region32: #{tpu_custom_call.1} parent=1 // pred_region
      %s76 = ssub.s32 2048, 2048
      %77 = vsyncadd [#allocation9], %s76
      %s78 = sshll.u32 [#allocation10], 4
      %s79 = int_to_ptr.vmem [resolvable:$true] %s78
      %84 = dma.hbm_to_vmem [thread:$0]  %s7, 2048, %s79, [#allocation9], 128, 128, 8
    $region33: #{tpu_custom_call.1} parent=1 // pred_fallthru
      _
    // Predicated region
    $region34: #{tpu_custom_call.1} parent=1 // pred_check
      _
    $region35: #{tpu_custom_call.1} parent=1 // pred_check_branch
      %86 = sbr.rel (0) target = $region37
    $region36: #{tpu_custom_call.1} parent=1 // pred_region
      _
    $region37: #{tpu_custom_call.1} parent=1 // pred_fallthru
      _
    // Predicated region
    $region38: #{tpu_custom_call.1} parent=1 // pred_check
      _
    $region39: #{tpu_custom_call.1} parent=1 // pred_check_branch
      %88 = sbr.rel (0) target = $region41
    $region40: #{tpu_custom_call.1} parent=1 // pred_region
      %s90 = ssub.s32 2048, 2048
      %91 = vsyncadd [#allocation12], %s90
      %s92 = sshll.u32 [#allocation11], 4
      %s93 = int_to_ptr.vmem [resolvable:$true] %s92
      %98 = dma.hbm_to_vmem [thread:$0]  %s9, 2048, %s93, [#allocation12], 128, 128, 8
    $region41: #{tpu_custom_call.1} parent=1 // pred_fallthru
      _
    // Predicated region
    $region42: #{tpu_custom_call.1} parent=1 // pred_check
      _
    $region43: #{tpu_custom_call.1} parent=1 // pred_check_branch
      %100 = sbr.rel (0) target = $region45
    $region44: #{tpu_custom_call.1} parent=1 // pred_region
      _
    $region45: #{tpu_custom_call.1} parent=1 // pred_fallthru
      _
    // Predicated region
    $region46: #{tpu_custom_call.1} parent=1 // pred_check
      _
    $region47: #{tpu_custom_call.1} parent=1 // pred_check_branch
      %102 = sbr.rel (0) target = $region49
    $region48: #{tpu_custom_call.1} parent=1 // pred_region
      %s104 = ssub.s32 6144, 6144
      %105 = vsyncadd [#allocation12], %s104
      %s106 = sshll.u32 [#allocation13], 4
      %s107 = int_to_ptr.vmem [resolvable:$true] %s106
      %112 = dma.hbm_to_vmem [thread:$0]  %s11, 6144, %s107, [#allocation12], 384, 384, 24
    $region49: #{tpu_custom_call.1} parent=1 // pred_fallthru
      _
    // Predicated region
    $region50: #{tpu_custom_call.1} parent=1 // pred_check
      _
    $region51: #{tpu_custom_call.1} parent=1 // pred_check_branch
      %114 = sbr.rel (0) target = $region53
    $region52: #{tpu_custom_call.1} parent=1 // pred_region
      _
    $region53: #{tpu_custom_call.1} parent=1 // pred_fallthru
      _
    // Predicated region
    $region54: #{tpu_custom_call.1} parent=1 // pred_check
      _
    $region55: #{tpu_custom_call.1} parent=1 // pred_check_branch
      %116 = sbr.rel (0) target = $region57
    $region56: #{tpu_custom_call.1} parent=1 // pred_region
      %117 = dma.done [#allocation3], 128
    $region57: #{tpu_custom_call.1} parent=1 // pred_fallthru
      _
    // Predicated region
    $region58: #{tpu_custom_call.1} parent=1 // pred_check
      _
    $region59: #{tpu_custom_call.1} parent=1 // pred_check_branch
      %119 = sbr.rel (0) target = $region61
    $region60: #{tpu_custom_call.1} parent=1 // pred_region
      %120 = dma.done [#allocation6], 256
    $region61: #{tpu_custom_call.1} parent=1 // pred_fallthru
      _
    // Predicated region
    $region62: #{tpu_custom_call.1} parent=1 // pred_check
      _
    $region63: #{tpu_custom_call.1} parent=1 // pred_check_branch
      %122 = sbr.rel (0) target = $region65
    $region64: #{tpu_custom_call.1} parent=1 // pred_region
      %123 = dma.done [#allocation6], 2048
    $region65: #{tpu_custom_call.1} parent=1 // pred_fallthru
      _
    // Predicated region
    $region66: #{tpu_custom_call.1} parent=1 // pred_check
      _
    $region67: #{tpu_custom_call.1} parent=1 // pred_check_branch
      %125 = sbr.rel (0) target = $region69
    $region68: #{tpu_custom_call.1} parent=1 // pred_region
      %126 = dma.done [#allocation9], 2048
    $region69: #{tpu_custom_call.1} parent=1 // pred_fallthru
      _
    // Predicated region
    $region70: #{tpu_custom_call.1} parent=1 // pred_check
      _
    $region71: #{tpu_custom_call.1} parent=1 // pred_check_branch
      %128 = sbr.rel (0) target = $region73
    $region72: #{tpu_custom_call.1} parent=1 // pred_region
      %129 = dma.done [#allocation9], 2048
    $region73: #{tpu_custom_call.1} parent=1 // pred_fallthru
      _
    // Predicated region
    $region74: #{tpu_custom_call.1} parent=1 // pred_check
      _
    $region75: #{tpu_custom_call.1} parent=1 // pred_check_branch
      %131 = sbr.rel (0) target = $region77
    $region76: #{tpu_custom_call.1} parent=1 // pred_region
      %132 = dma.done [#allocation12], 2048
    $region77: #{tpu_custom_call.1} parent=1 // pred_fallthru
      _
    // Predicated region
    $region78: #{tpu_custom_call.1} parent=1 // pred_check
      _
    $region79: #{tpu_custom_call.1} parent=1 // pred_check_branch
      %134 = sbr.rel (0) target = $region81
    $region80: #{tpu_custom_call.1} parent=1 // pred_region
      %135 = dma.done [#allocation12], 6144
    $region81: #{tpu_custom_call.1} parent=1 // pred_fallthru
      _
    %v136 = vld [vmem:[#allocation2] sm:$0xff]
    %v137 = vld [vmem:[#allocation5] sm:$0xff]
    %v138 = vld [vmem:[#allocation5 + $0x8] sm:$0xff]
    %v139 = vld [vmem:[%s2] sm:$0x3]
    %v141 = vlaneseq
    %v142 = vshrl.u32 %v141, 7
    %v143 = vsub.s32 0, %v142
    %v144 = vrot.slane %v139, %v143
    %v145 = vlaneseq
    %v146 = vshrl.u32 %v145, 7
    %v147 = vsub.s32 1, %v146
    %v148 = vrot.slane %v139, %v147
    %vm151 = vcmask 64512
    %v153 = vsel %vm151, %v136, 0
    %155 = vmatprep.subr.mxu0 %v138
    %156 = vmatpush1.msra.mxu0 %v137
    %157 = vmatprep.subr.mxu0 0.0
    %158 = vmatpush1.msra.mxu0 0.0
    %159 = vmatprep.subr.mxu0 0.0
    %160 = vmatpush1.msra.mxu0 0.0
    %161 = vmatprep.subr.mxu0 0.0
    %162 = vmatpush1.msra.mxu0 0.0
    %163 = vmatprep.subr.mxu0 0.0
    %164 = vmatpush1.msra.mxu0 0.0
    %165 = vmatprep.subr.mxu0 0.0
    %166 = vmatpush1.msra.mxu0 0.0
    %167 = vmatprep.subr.mxu0 0.0
    %168 = vmatpush1.msra.mxu0 0.0
    %169 = vmatprep.subr.mxu0 0.0
    %170 = vmatpush1.msra.mxu0 0.0
    %171 = vmatprep.subr.mxu0 0.0
    %172 = vmatpush1.msra.mxu0 0.0
    %173 = vmatprep.subr.mxu0 0.0
    %174 = vmatpush1.msra.mxu0 0.0
    %175 = vmatprep.subr.mxu0 0.0
    %176 = vmatpush1.msra.mxu0 0.0
    %177 = vmatprep.subr.mxu0 0.0
    %178 = vmatpush1.msra.mxu0 0.0
    %179 = vmatprep.subr.mxu0 0.0
    %180 = vmatpush1.msra.mxu0 0.0
    %181 = vmatprep.subr.mxu0 0.0
    %182 = vmatpush1.msra.mxu0 0.0
    %183 = vmatprep.subr.mxu0 0.0
    %184 = vmatpush1.msra.mxu0 0.0
    %185 = vmatprep.subr.mxu0 0.0
    %186 = vmatpush1.msra.mxu0 0.0
    %187 = vmatprep.subr.mxu0 0.0
    %188 = vmatpush1.msra.mxu0 0.0
    %189 = vmatprep.subr.mxu0 0.0
    %190 = vmatpush1.msra.mxu0 0.0
    %191 = vmatprep.subr.mxu0 0.0
    %192 = vmatpush1.msra.mxu0 0.0
    %193 = vmatprep.subr.mxu0 0.0
    %194 = vmatpush1.msra.mxu0 0.0
    %195 = vmatprep.subr.mxu0 0.0
    %196 = vmatpush1.msra.mxu0 0.0
    %197 = vmatprep.subr.mxu0 0.0
    %198 = vmatpush1.msra.mxu0 0.0
    %199 = vmatprep.subr.mxu0 0.0
    %200 = vmatpush1.msra.mxu0 0.0
    %201 = vmatprep.subr.mxu0 0.0
    %202 = vmatpush1.msra.mxu0 0.0
    %203 = vmatprep.subr.mxu0 0.0
    %204 = vmatpush1.msra.mxu0 0.0
    %205 = vmatprep.subr.mxu0 0.0
    %206 = vmatpush1.msra.mxu0 0.0
    %207 = vmatprep.subr.mxu0 0.0
    %208 = vmatpush1.msra.mxu0 0.0
    %209 = vmatprep.subr.mxu0 0.0
    %210 = vmatpush1.msra.mxu0 0.0
    %211 = vmatprep.subr.mxu0 0.0
    %212 = vmatpush1.msra.mxu0 0.0
    %213 = vmatprep.subr.mxu0 0.0
    %214 = vmatpush1.msra.mxu0 0.0
    %215 = vmatprep.subr.mxu0 0.0
    %216 = vmatpush1.msra.mxu0 0.0
    %217 = vmatprep.subr.mxu0 0.0
    %218 = vmatpush1.msra.mxu0 0.0
    %219 = vmatprep.mubr.f32.mxu0 0.0
    %220 = vmatmul.mubr.f32.gmra.mrb[0].mxu0 %v153
    %v221 = vpop.f32.mrb[0].mxu0
    %v222 = vadd.f32 %v144, %v221
    %v223 = vpop.f32.mrb[0].mxu0
    %v224 = vadd.f32 %v148, %v223
    %225 = vdwg.mxu0
    %v226 = vmax.f32 %v222, 0.0
    %v227 = vmax.f32 %v224, 0.0
    %v228 = vld [vmem:[#allocation7] sm:$0xff]
    %v229 = vld [vmem:[#allocation7 + $0x8] sm:$0xff]
    %v230 = vld [vmem:[#allocation7 + $0x10] sm:$0xff]
    %v231 = vld [vmem:[#allocation7 + $0x18] sm:$0xff]
    %v232 = vld [vmem:[#allocation7 + $0x20] sm:$0xff]
    %v233 = vld [vmem:[#allocation7 + $0x28] sm:$0xff]
    %v234 = vld [vmem:[#allocation7 + $0x30] sm:$0xff]
    %v235 = vld [vmem:[#allocation7 + $0x38] sm:$0xff]
    %v236 = vld [vmem:[#allocation7 + $0x40] sm:$0xff]
    %v237 = vld [vmem:[#allocation7 + $0x48] sm:$0xff]
    %v238 = vld [vmem:[#allocation7 + $0x50] sm:$0xff]
    %v239 = vld [vmem:[#allocation7 + $0x58] sm:$0xff]
    %v240 = vld [vmem:[#allocation7 + $0x60] sm:$0xff]
    %v241 = vld [vmem:[#allocation7 + $0x68] sm:$0xff]
    %v242 = vld [vmem:[#allocation7 + $0x70] sm:$0xff]
    %v243 = vld [vmem:[#allocation7 + $0x78] sm:$0xff]
    %v244 = vld [vmem:[%s4] sm:$0x1]
    %v246 = vlaneseq
    %v247 = vshrl.u32 %v246, 7
    %v248 = vsub.s32 0, %v247
    %v249 = vrot.slane %v244, %v248
    %251 = vmatprep.subr.mxu0 0.0
    %252 = vmatpush1.msra.mxu0 %v228
    %253 = vmatprep.subr.mxu0 0.0
    %254 = vmatpush1.msra.mxu0 %v229
    %255 = vmatprep.subr.mxu0 0.0
    %256 = vmatpush1.msra.mxu0 %v230
    %257 = vmatprep.subr.mxu0 0.0
    %258 = vmatpush1.msra.mxu0 %v231
    %259 = vmatprep.subr.mxu0 0.0
    %260 = vmatpush1.msra.mxu0 %v232
    %261 = vmatprep.subr.mxu0 0.0
    %262 = vmatpush1.msra.mxu0 %v233
    %263 = vmatprep.subr.mxu0 0.0
    %264 = vmatpush1.msra.mxu0 %v234
    %265 = vmatprep.subr.mxu0 0.0
    %266 = vmatpush1.msra.mxu0 %v235
    %267 = vmatprep.subr.mxu0 0.0
    %268 = vmatpush1.msra.mxu0 %v236
    %269 = vmatprep.subr.mxu0 0.0
    %270 = vmatpush1.msra.mxu0 %v237
    %271 = vmatprep.subr.mxu0 0.0
    %272 = vmatpush1.msra.mxu0 %v238
    %273 = vmatprep.subr.mxu0 0.0
    %274 = vmatpush1.msra.mxu0 %v239
    %275 = vmatprep.subr.mxu0 0.0
    %276 = vmatpush1.msra.mxu0 %v240
    %277 = vmatprep.subr.mxu0 0.0
    %278 = vmatpush1.msra.mxu0 %v241
    %279 = vmatprep.subr.mxu0 0.0
    %280 = vmatpush1.msra.mxu0 %v242
    %281 = vmatprep.subr.mxu0 0.0
    %282 = vmatpush1.msra.mxu0 %v243
    %283 = vmatprep.subr.mxu0 0.0
    %284 = vmatpush1.msra.mxu0 0.0
    %285 = vmatprep.subr.mxu0 0.0
    %286 = vmatpush1.msra.mxu0 0.0
    %287 = vmatprep.subr.mxu0 0.0
    %288 = vmatpush1.msra.mxu0 0.0
    %289 = vmatprep.subr.mxu0 0.0
    %290 = vmatpush1.msra.mxu0 0.0
    %291 = vmatprep.subr.mxu0 0.0
    %292 = vmatpush1.msra.mxu0 0.0
    %293 = vmatprep.subr.mxu0 0.0
    %294 = vmatpush1.msra.mxu0 0.0
    %295 = vmatprep.subr.mxu0 0.0
    %296 = vmatpush1.msra.mxu0 0.0
    %297 = vmatprep.subr.mxu0 0.0
    %298 = vmatpush1.msra.mxu0 0.0
    %299 = vmatprep.subr.mxu0 0.0
    %300 = vmatpush1.msra.mxu0 0.0
    %301 = vmatprep.subr.mxu0 0.0
    %302 = vmatpush1.msra.mxu0 0.0
    %303 = vmatprep.subr.mxu0 0.0
    %304 = vmatpush1.msra.mxu0 0.0
    %305 = vmatprep.subr.mxu0 0.0
    %306 = vmatpush1.msra.mxu0 0.0
    %307 = vmatprep.subr.mxu0 0.0
    %308 = vmatpush1.msra.mxu0 0.0
    %309 = vmatprep.subr.mxu0 0.0
    %310 = vmatpush1.msra.mxu0 0.0
    %311 = vmatprep.subr.mxu0 0.0
    %312 = vmatpush1.msra.mxu0 0.0
    %313 = vmatprep.subr.mxu0 0.0
    %314 = vmatpush1.msra.mxu0 0.0
    %315 = vmatprep.mubr.f32.mxu0 0.0
    %316 = vmatmul.mubr.f32.gmra.mrb[0].mxu0 %v226
    %v317 = vpop.f32.mrb[0].mxu0
    %v318 = vadd.f32 %v249, %v317
    %v319 = vpop.f32.mrb[0].mxu0
    %320 = vdwg.mxu0
    %v321 = vmax.f32 %v318, 0.0
    %v322 = vadd.f32 %v227, %v321
    %v323 = vld [vmem:[#allocation8] sm:$0xff]
    %v324 = vld [vmem:[#allocation8 + $0x8] sm:$0xff]
    %v325 = vld [vmem:[#allocation8 + $0x10] sm:$0xff]
    %v326 = vld [vmem:[#allocation8 + $0x18] sm:$0xff]
    %v327 = vld [vmem:[#allocation8 + $0x20] sm:$0xff]
    %v328 = vld [vmem:[#allocation8 + $0x28] sm:$0xff]
    %v329 = vld [vmem:[#allocation8 + $0x30] sm:$0xff]
    %v330 = vld [vmem:[#allocation8 + $0x38] sm:$0xff]
    %v331 = vld [vmem:[#allocation8 + $0x40] sm:$0xff]
    %v332 = vld [vmem:[#allocation8 + $0x48] sm:$0xff]
    %v333 = vld [vmem:[#allocation8 + $0x50] sm:$0xff]
    %v334 = vld [vmem:[#allocation8 + $0x58] sm:$0xff]
    %v335 = vld [vmem:[#allocation8 + $0x60] sm:$0xff]
    %v336 = vld [vmem:[#allocation8 + $0x68] sm:$0xff]
    %v337 = vld [vmem:[#allocation8 + $0x70] sm:$0xff]
    %v338 = vld [vmem:[#allocation8 + $0x78] sm:$0xff]
    %v339 = vld [vmem:[%s6] sm:$0x1]
    %v341 = vlaneseq
    %v342 = vshrl.u32 %v341, 7
    %v343 = vsub.s32 0, %v342
    %v344 = vrot.slane %v339, %v343
    %346 = vmatprep.subr.mxu0 0.0
    %347 = vmatpush1.msra.mxu0 %v323
    %348 = vmatprep.subr.mxu0 0.0
    %349 = vmatpush1.msra.mxu0 %v324
    %350 = vmatprep.subr.mxu0 0.0
    %351 = vmatpush1.msra.mxu0 %v325
    %352 = vmatprep.subr.mxu0 0.0
    %353 = vmatpush1.msra.mxu0 %v326
    %354 = vmatprep.subr.mxu0 0.0
    %355 = vmatpush1.msra.mxu0 %v327
    %356 = vmatprep.subr.mxu0 0.0
    %357 = vmatpush1.msra.mxu0 %v328
    %358 = vmatprep.subr.mxu0 0.0
    %359 = vmatpush1.msra.mxu0 %v329
    %360 = vmatprep.subr.mxu0 0.0
    %361 = vmatpush1.msra.mxu0 %v330
    %362 = vmatprep.subr.mxu0 0.0
    %363 = vmatpush1.msra.mxu0 %v331
    %364 = vmatprep.subr.mxu0 0.0
    %365 = vmatpush1.msra.mxu0 %v332
    %366 = vmatprep.subr.mxu0 0.0
    %367 = vmatpush1.msra.mxu0 %v333
    %368 = vmatprep.subr.mxu0 0.0
    %369 = vmatpush1.msra.mxu0 %v334
    %370 = vmatprep.subr.mxu0 0.0
    %371 = vmatpush1.msra.mxu0 %v335
    %372 = vmatprep.subr.mxu0 0.0
    %373 = vmatpush1.msra.mxu0 %v336
    %374 = vmatprep.subr.mxu0 0.0
    %375 = vmatpush1.msra.mxu0 %v337
    %376 = vmatprep.subr.mxu0 0.0
    %377 = vmatpush1.msra.mxu0 %v338
    %378 = vmatprep.subr.mxu0 0.0
    %379 = vmatpush1.msra.mxu0 0.0
    %380 = vmatprep.subr.mxu0 0.0
    %381 = vmatpush1.msra.mxu0 0.0
    %382 = vmatprep.subr.mxu0 0.0
    %383 = vmatpush1.msra.mxu0 0.0
    %384 = vmatprep.subr.mxu0 0.0
    %385 = vmatpush1.msra.mxu0 0.0
    %386 = vmatprep.subr.mxu0 0.0
    %387 = vmatpush1.msra.mxu0 0.0
    %388 = vmatprep.subr.mxu0 0.0
    %389 = vmatpush1.msra.mxu0 0.0
    %390 = vmatprep.subr.mxu0 0.0
    %391 = vmatpush1.msra.mxu0 0.0
    %392 = vmatprep.subr.mxu0 0.0
    %393 = vmatpush1.msra.mxu0 0.0
    %394 = vmatprep.subr.mxu0 0.0
    %395 = vmatpush1.msra.mxu0 0.0
    %396 = vmatprep.subr.mxu0 0.0
    %397 = vmatpush1.msra.mxu0 0.0
    %398 = vmatprep.subr.mxu0 0.0
    %399 = vmatpush1.msra.mxu0 0.0
    %400 = vmatprep.subr.mxu0 0.0
    %401 = vmatpush1.msra.mxu0 0.0
    %402 = vmatprep.subr.mxu0 0.0
    %403 = vmatpush1.msra.mxu0 0.0
    %404 = vmatprep.subr.mxu0 0.0
    %405 = vmatpush1.msra.mxu0 0.0
    %406 = vmatprep.subr.mxu0 0.0
    %407 = vmatpush1.msra.mxu0 0.0
    %408 = vmatprep.subr.mxu0 0.0
    %409 = vmatpush1.msra.mxu0 0.0
    %410 = vmatprep.mubr.f32.mxu0 0.0
    %411 = vmatmul.mubr.f32.gmra.mrb[0].mxu0 %v322
    %v412 = vpop.f32.mrb[0].mxu0
    %v413 = vadd.f32 %v344, %v412
    %v414 = vpop.f32.mrb[0].mxu0
    %415 = vdwg.mxu0
    %v416 = vmax.f32 %v413, 0.0
    %v417 = vld [vmem:[#allocation10] sm:$0xff]
    %v418 = vld [vmem:[#allocation10 + $0x8] sm:$0xff]
    %v419 = vld [vmem:[#allocation10 + $0x10] sm:$0xff]
    %v420 = vld [vmem:[#allocation10 + $0x18] sm:$0xff]
    %v421 = vld [vmem:[#allocation10 + $0x20] sm:$0xff]
    %v422 = vld [vmem:[#allocation10 + $0x28] sm:$0xff]
    %v423 = vld [vmem:[#allocation10 + $0x30] sm:$0xff]
    %v424 = vld [vmem:[#allocation10 + $0x38] sm:$0xff]
    %v425 = vld [vmem:[#allocation10 + $0x40] sm:$0xff]
    %v426 = vld [vmem:[#allocation10 + $0x48] sm:$0xff]
    %v427 = vld [vmem:[#allocation10 + $0x50] sm:$0xff]
    %v428 = vld [vmem:[#allocation10 + $0x58] sm:$0xff]
    %v429 = vld [vmem:[#allocation10 + $0x60] sm:$0xff]
    %v430 = vld [vmem:[#allocation10 + $0x68] sm:$0xff]
    %v431 = vld [vmem:[#allocation10 + $0x70] sm:$0xff]
    %v432 = vld [vmem:[#allocation10 + $0x78] sm:$0xff]
    %v433 = vld [vmem:[%s8] sm:$0x1]
    %v435 = vlaneseq
    %v436 = vshrl.u32 %v435, 7
    %v437 = vsub.s32 0, %v436
    %v438 = vrot.slane %v433, %v437
    %440 = vmatprep.subr.mxu0 0.0
    %441 = vmatpush1.msra.mxu0 %v417
    %442 = vmatprep.subr.mxu0 0.0
    %443 = vmatpush1.msra.mxu0 %v418
    %444 = vmatprep.subr.mxu0 0.0
    %445 = vmatpush1.msra.mxu0 %v419
    %446 = vmatprep.subr.mxu0 0.0
    %447 = vmatpush1.msra.mxu0 %v420
    %448 = vmatprep.subr.mxu0 0.0
    %449 = vmatpush1.msra.mxu0 %v421
    %450 = vmatprep.subr.mxu0 0.0
    %451 = vmatpush1.msra.mxu0 %v422
    %452 = vmatprep.subr.mxu0 0.0
    %453 = vmatpush1.msra.mxu0 %v423
    %454 = vmatprep.subr.mxu0 0.0
    %455 = vmatpush1.msra.mxu0 %v424
    %456 = vmatprep.subr.mxu0 0.0
    %457 = vmatpush1.msra.mxu0 %v425
    %458 = vmatprep.subr.mxu0 0.0
    %459 = vmatpush1.msra.mxu0 %v426
    %460 = vmatprep.subr.mxu0 0.0
    %461 = vmatpush1.msra.mxu0 %v427
    %462 = vmatprep.subr.mxu0 0.0
    %463 = vmatpush1.msra.mxu0 %v428
    %464 = vmatprep.subr.mxu0 0.0
    %465 = vmatpush1.msra.mxu0 %v429
    %466 = vmatprep.subr.mxu0 0.0
    %467 = vmatpush1.msra.mxu0 %v430
    %468 = vmatprep.subr.mxu0 0.0
    %469 = vmatpush1.msra.mxu0 %v431
    %470 = vmatprep.subr.mxu0 0.0
    %471 = vmatpush1.msra.mxu0 %v432
    %472 = vmatprep.subr.mxu0 0.0
    %473 = vmatpush1.msra.mxu0 0.0
    %474 = vmatprep.subr.mxu0 0.0
    %475 = vmatpush1.msra.mxu0 0.0
    %476 = vmatprep.subr.mxu0 0.0
    %477 = vmatpush1.msra.mxu0 0.0
    %478 = vmatprep.subr.mxu0 0.0
    %479 = vmatpush1.msra.mxu0 0.0
    %480 = vmatprep.subr.mxu0 0.0
    %481 = vmatpush1.msra.mxu0 0.0
    %482 = vmatprep.subr.mxu0 0.0
    %483 = vmatpush1.msra.mxu0 0.0
    %484 = vmatprep.subr.mxu0 0.0
    %485 = vmatpush1.msra.mxu0 0.0
    %486 = vmatprep.subr.mxu0 0.0
    %487 = vmatpush1.msra.mxu0 0.0
    %488 = vmatprep.subr.mxu0 0.0
    %489 = vmatpush1.msra.mxu0 0.0
    %490 = vmatprep.subr.mxu0 0.0
    %491 = vmatpush1.msra.mxu0 0.0
    %492 = vmatprep.subr.mxu0 0.0
    %493 = vmatpush1.msra.mxu0 0.0
    %494 = vmatprep.subr.mxu0 0.0
    %495 = vmatpush1.msra.mxu0 0.0
    %496 = vmatprep.subr.mxu0 0.0
    %497 = vmatpush1.msra.mxu0 0.0
    %498 = vmatprep.subr.mxu0 0.0
    %499 = vmatpush1.msra.mxu0 0.0
    %500 = vmatprep.subr.mxu0 0.0
    %501 = vmatpush1.msra.mxu0 0.0
    %502 = vmatprep.subr.mxu0 0.0
    %503 = vmatpush1.msra.mxu0 0.0
    %504 = vmatprep.mubr.f32.mxu0 0.0
    %505 = vmatmul.mubr.f32.gmra.mrb[0].mxu0 %v416
    %v506 = vpop.f32.mrb[0].mxu0
    %v507 = vadd.f32 %v438, %v506
    %v508 = vpop.f32.mrb[0].mxu0
    %509 = vdwg.mxu0
    %v510 = vmax.f32 %v507, 0.0
    %v511 = vld [vmem:[#allocation11] sm:$0xff]
    %v512 = vld [vmem:[#allocation11 + $0x8] sm:$0xff]
    %v513 = vld [vmem:[#allocation11 + $0x10] sm:$0xff]
    %v514 = vld [vmem:[#allocation11 + $0x18] sm:$0xff]
    %v515 = vld [vmem:[#allocation11 + $0x20] sm:$0xff]
    %v516 = vld [vmem:[#allocation11 + $0x28] sm:$0xff]
    %v517 = vld [vmem:[#allocation11 + $0x30] sm:$0xff]
    %v518 = vld [vmem:[#allocation11 + $0x38] sm:$0xff]
    %v519 = vld [vmem:[#allocation11 + $0x40] sm:$0xff]
    %v520 = vld [vmem:[#allocation11 + $0x48] sm:$0xff]
    %v521 = vld [vmem:[#allocation11 + $0x50] sm:$0xff]
    %v522 = vld [vmem:[#allocation11 + $0x58] sm:$0xff]
    %v523 = vld [vmem:[#allocation11 + $0x60] sm:$0xff]
    %v524 = vld [vmem:[#allocation11 + $0x68] sm:$0xff]
    %v525 = vld [vmem:[#allocation11 + $0x70] sm:$0xff]
    %v526 = vld [vmem:[#allocation11 + $0x78] sm:$0xff]
    %v527 = vld [vmem:[%s10] sm:$0x1]
    %v529 = vlaneseq
    %v530 = vshrl.u32 %v529, 7
    %v531 = vsub.s32 0, %v530
    %v532 = vrot.slane %v527, %v531
    %534 = vmatprep.subr.mxu0 0.0
    %535 = vmatpush1.msra.mxu0 %v511
    %536 = vmatprep.subr.mxu0 0.0
    %537 = vmatpush1.msra.mxu0 %v512
    %538 = vmatprep.subr.mxu0 0.0
    %539 = vmatpush1.msra.mxu0 %v513
    %540 = vmatprep.subr.mxu0 0.0
    %541 = vmatpush1.msra.mxu0 %v514
    %542 = vmatprep.subr.mxu0 0.0
    %543 = vmatpush1.msra.mxu0 %v515
    %544 = vmatprep.subr.mxu0 0.0
    %545 = vmatpush1.msra.mxu0 %v516
    %546 = vmatprep.subr.mxu0 0.0
    %547 = vmatpush1.msra.mxu0 %v517
    %548 = vmatprep.subr.mxu0 0.0
    %549 = vmatpush1.msra.mxu0 %v518
    %550 = vmatprep.subr.mxu0 0.0
    %551 = vmatpush1.msra.mxu0 %v519
    %552 = vmatprep.subr.mxu0 0.0
    %553 = vmatpush1.msra.mxu0 %v520
    %554 = vmatprep.subr.mxu0 0.0
    %555 = vmatpush1.msra.mxu0 %v521
    %556 = vmatprep.subr.mxu0 0.0
    %557 = vmatpush1.msra.mxu0 %v522
    %558 = vmatprep.subr.mxu0 0.0
    %559 = vmatpush1.msra.mxu0 %v523
    %560 = vmatprep.subr.mxu0 0.0
    %561 = vmatpush1.msra.mxu0 %v524
    %562 = vmatprep.subr.mxu0 0.0
    %563 = vmatpush1.msra.mxu0 %v525
    %564 = vmatprep.subr.mxu0 0.0
    %565 = vmatpush1.msra.mxu0 %v526
    %566 = vmatprep.subr.mxu0 0.0
    %567 = vmatpush1.msra.mxu0 0.0
    %568 = vmatprep.subr.mxu0 0.0
    %569 = vmatpush1.msra.mxu0 0.0
    %570 = vmatprep.subr.mxu0 0.0
    %571 = vmatpush1.msra.mxu0 0.0
    %572 = vmatprep.subr.mxu0 0.0
    %573 = vmatpush1.msra.mxu0 0.0
    %574 = vmatprep.subr.mxu0 0.0
    %575 = vmatpush1.msra.mxu0 0.0
    %576 = vmatprep.subr.mxu0 0.0
    %577 = vmatpush1.msra.mxu0 0.0
    %578 = vmatprep.subr.mxu0 0.0
    %579 = vmatpush1.msra.mxu0 0.0
    %580 = vmatprep.subr.mxu0 0.0
    %581 = vmatpush1.msra.mxu0 0.0
    %582 = vmatprep.subr.mxu0 0.0
    %583 = vmatpush1.msra.mxu0 0.0
    %584 = vmatprep.subr.mxu0 0.0
    %585 = vmatpush1.msra.mxu0 0.0
    %586 = vmatprep.subr.mxu0 0.0
    %587 = vmatpush1.msra.mxu0 0.0
    %588 = vmatprep.subr.mxu0 0.0
    %589 = vmatpush1.msra.mxu0 0.0
    %590 = vmatprep.subr.mxu0 0.0
    %591 = vmatpush1.msra.mxu0 0.0
    %592 = vmatprep.subr.mxu0 0.0
    %593 = vmatpush1.msra.mxu0 0.0
    %594 = vmatprep.subr.mxu0 0.0
    %595 = vmatpush1.msra.mxu0 0.0
    %596 = vmatprep.subr.mxu0 0.0
    %597 = vmatpush1.msra.mxu0 0.0
    %598 = vmatprep.mubr.f32.mxu0 0.0
    %599 = vmatmul.mubr.f32.gmra.mrb[0].mxu0 %v510
    %v600 = vpop.f32.mrb[0].mxu0
    %v601 = vadd.f32 %v532, %v600
    %v602 = vpop.f32.mrb[0].mxu0
    %603 = vdwg.mxu0
    %v604 = vmax.f32 %v601, 0.0
    %v605 = vld [vmem:[#allocation13] sm:$0xff]
    %v606 = vld [vmem:[#allocation13 + $0x8] sm:$0xff]
    %v607 = vld [vmem:[#allocation13 + $0x10] sm:$0xff]
    %v608 = vld [vmem:[#allocation13 + $0x18] sm:$0xff]
    %v609 = vld [vmem:[#allocation13 + $0x20] sm:$0xff]
    %v610 = vld [vmem:[#allocation13 + $0x28] sm:$0xff]
    %v611 = vld [vmem:[#allocation13 + $0x30] sm:$0xff]
    %v612 = vld [vmem:[#allocation13 + $0x38] sm:$0xff]
    %v613 = vld [vmem:[#allocation13 + $0x40] sm:$0xff]
    %v614 = vld [vmem:[#allocation13 + $0x48] sm:$0xff]
    %v615 = vld [vmem:[#allocation13 + $0x50] sm:$0xff]
    %v616 = vld [vmem:[#allocation13 + $0x58] sm:$0xff]
    %v617 = vld [vmem:[#allocation13 + $0x60] sm:$0xff]
    %v618 = vld [vmem:[#allocation13 + $0x68] sm:$0xff]
    %v619 = vld [vmem:[#allocation13 + $0x70] sm:$0xff]
    %v620 = vld [vmem:[#allocation13 + $0x78] sm:$0xff]
    %v621 = vld [vmem:[#allocation13 + $0x80] sm:$0xff]
    %v622 = vld [vmem:[#allocation13 + $0x88] sm:$0xff]
    %v623 = vld [vmem:[#allocation13 + $0x90] sm:$0xff]
    %v624 = vld [vmem:[#allocation13 + $0x98] sm:$0xff]
    %v625 = vld [vmem:[#allocation13 + $0xa0] sm:$0xff]
    %v626 = vld [vmem:[#allocation13 + $0xa8] sm:$0xff]
    %v627 = vld [vmem:[#allocation13 + $0xb0] sm:$0xff]
    %v628 = vld [vmem:[#allocation13 + $0xb8] sm:$0xff]
    %v629 = vld [vmem:[#allocation13 + $0xc0] sm:$0xff]
    %v630 = vld [vmem:[#allocation13 + $0xc8] sm:$0xff]
    %v631 = vld [vmem:[#allocation13 + $0xd0] sm:$0xff]
    %v632 = vld [vmem:[#allocation13 + $0xd8] sm:$0xff]
    %v633 = vld [vmem:[#allocation13 + $0xe0] sm:$0xff]
    %v634 = vld [vmem:[#allocation13 + $0xe8] sm:$0xff]
    %v635 = vld [vmem:[#allocation13 + $0xf0] sm:$0xff]
    %v636 = vld [vmem:[#allocation13 + $0xf8] sm:$0xff]
    %v637 = vld [vmem:[#allocation13 + $0x100] sm:$0xff]
    %v638 = vld [vmem:[#allocation13 + $0x108] sm:$0xff]
    %v639 = vld [vmem:[#allocation13 + $0x110] sm:$0xff]
    %v640 = vld [vmem:[#allocation13 + $0x118] sm:$0xff]
    %v641 = vld [vmem:[#allocation13 + $0x120] sm:$0xff]
    %v642 = vld [vmem:[#allocation13 + $0x128] sm:$0xff]
    %v643 = vld [vmem:[#allocation13 + $0x130] sm:$0xff]
    %v644 = vld [vmem:[#allocation13 + $0x138] sm:$0xff]
    %v645 = vld [vmem:[#allocation13 + $0x140] sm:$0xff]
    %v646 = vld [vmem:[#allocation13 + $0x148] sm:$0xff]
    %v647 = vld [vmem:[#allocation13 + $0x150] sm:$0xff]
    %v648 = vld [vmem:[#allocation13 + $0x158] sm:$0xff]
    %v649 = vld [vmem:[#allocation13 + $0x160] sm:$0xff]
    %v650 = vld [vmem:[#allocation13 + $0x168] sm:$0xff]
    %v651 = vld [vmem:[#allocation13 + $0x170] sm:$0xff]
    %v652 = vld [vmem:[#allocation13 + $0x178] sm:$0xff]
    %v653 = vld [vmem:[%s12] sm:$0x7]
    %v655 = vlaneseq
    %v656 = vshrl.u32 %v655, 7
    %v657 = vsub.s32 0, %v656
    %v658 = vrot.slane %v653, %v657
    %v659 = vlaneseq
    %v660 = vshrl.u32 %v659, 7
    %v661 = vsub.s32 1, %v660
    %v662 = vrot.slane %v653, %v661
    %v663 = vlaneseq
    %v664 = vshrl.u32 %v663, 7
    %v665 = vsub.s32 2, %v664
    %v666 = vrot.slane %v653, %v665
    %670 = vmatprep.subr.mxu0 %v606
    %671 = vmatpush1.msra.mxu0 %v605
    %672 = vmatprep.subr.mxu0 %v609
    %673 = vmatpush1.msra.mxu0 %v608
    %674 = vmatprep.subr.mxu0 %v612
    %675 = vmatpush1.msra.mxu0 %v611
    %676 = vmatprep.subr.mxu0 %v615
    %677 = vmatpush1.msra.mxu0 %v614
    %678 = vmatprep.subr.mxu0 %v618
    %679 = vmatpush1.msra.mxu0 %v617
    %680 = vmatprep.subr.mxu0 %v621
    %681 = vmatpush1.msra.mxu0 %v620
    %682 = vmatprep.subr.mxu0 %v624
    %683 = vmatpush1.msra.mxu0 %v623
    %684 = vmatprep.subr.mxu0 %v627
    %685 = vmatpush1.msra.mxu0 %v626
    %686 = vmatprep.subr.mxu0 %v630
    %687 = vmatpush1.msra.mxu0 %v629
    %688 = vmatprep.subr.mxu0 %v633
    %689 = vmatpush1.msra.mxu0 %v632
    %690 = vmatprep.subr.mxu0 %v636
    %691 = vmatpush1.msra.mxu0 %v635
    %692 = vmatprep.subr.mxu0 %v639
    %693 = vmatpush1.msra.mxu0 %v638
    %694 = vmatprep.subr.mxu0 %v642
    %695 = vmatpush1.msra.mxu0 %v641
    %696 = vmatprep.subr.mxu0 %v645
    %697 = vmatpush1.msra.mxu0 %v644
    %698 = vmatprep.subr.mxu0 %v648
    %699 = vmatpush1.msra.mxu0 %v647
    %700 = vmatprep.subr.mxu0 %v651
    %701 = vmatpush1.msra.mxu0 %v650
    %702 = vmatprep.subr.mxu0 0.0
    %703 = vmatpush1.msra.mxu0 0.0
    %704 = vmatprep.subr.mxu0 0.0
    %705 = vmatpush1.msra.mxu0 0.0
    %706 = vmatprep.subr.mxu0 0.0
    %707 = vmatpush1.msra.mxu0 0.0
    %708 = vmatprep.subr.mxu0 0.0
    %709 = vmatpush1.msra.mxu0 0.0
    %710 = vmatprep.subr.mxu0 0.0
    %711 = vmatpush1.msra.mxu0 0.0
    %712 = vmatprep.subr.mxu0 0.0
    %713 = vmatpush1.msra.mxu0 0.0
    %714 = vmatprep.subr.mxu0 0.0
    %715 = vmatpush1.msra.mxu0 0.0
    %716 = vmatprep.subr.mxu0 0.0
    %717 = vmatpush1.msra.mxu0 0.0
    %718 = vmatprep.subr.mxu0 0.0
    %719 = vmatpush1.msra.mxu0 0.0
    %720 = vmatprep.subr.mxu0 0.0
    %721 = vmatpush1.msra.mxu0 0.0
    %722 = vmatprep.subr.mxu0 0.0
    %723 = vmatpush1.msra.mxu0 0.0
    %724 = vmatprep.subr.mxu0 0.0
    %725 = vmatpush1.msra.mxu0 0.0
    %726 = vmatprep.subr.mxu0 0.0
    %727 = vmatpush1.msra.mxu0 0.0
    %728 = vmatprep.subr.mxu0 0.0
    %729 = vmatpush1.msra.mxu0 0.0
    %730 = vmatprep.subr.mxu0 0.0
    %731 = vmatpush1.msra.mxu0 0.0
    %732 = vmatprep.subr.mxu0 0.0
    %733 = vmatpush1.msra.mxu0 0.0
    %734 = vmatprep.mubr.f32.mxu0 0.0
    %735 = vmatmul.mubr.f32.gmra.mrb[0].mxu0 %v604
    %v736 = vpop.f32.mrb[0].mxu0
    %v737 = vadd.f32 %v658, %v736
    %v738 = vpop.f32.mrb[0].mxu0
    %v739 = vadd.f32 %v662, %v738
    %740 = vdwg.mxu0
    %741 = vmatprep.subr.mxu0 0.0
    %742 = vmatpush1.msra.mxu0 %v607
    %743 = vmatprep.subr.mxu0 0.0
    %744 = vmatpush1.msra.mxu0 %v610
    %745 = vmatprep.subr.mxu0 0.0
    %746 = vmatpush1.msra.mxu0 %v613
    %747 = vmatprep.subr.mxu0 0.0
    %748 = vmatpush1.msra.mxu0 %v616
    %749 = vmatprep.subr.mxu0 0.0
    %750 = vmatpush1.msra.mxu0 %v619
    %751 = vmatprep.subr.mxu0 0.0
    %752 = vmatpush1.msra.mxu0 %v622
    %753 = vmatprep.subr.mxu0 0.0
    %754 = vmatpush1.msra.mxu0 %v625
    %755 = vmatprep.subr.mxu0 0.0
    %756 = vmatpush1.msra.mxu0 %v628
    %757 = vmatprep.subr.mxu0 0.0
    %758 = vmatpush1.msra.mxu0 %v631
    %759 = vmatprep.subr.mxu0 0.0
    %760 = vmatpush1.msra.mxu0 %v634
    %761 = vmatprep.subr.mxu0 0.0
    %762 = vmatpush1.msra.mxu0 %v637
    %763 = vmatprep.subr.mxu0 0.0
    %764 = vmatpush1.msra.mxu0 %v640
    %765 = vmatprep.subr.mxu0 0.0
    %766 = vmatpush1.msra.mxu0 %v643
    %767 = vmatprep.subr.mxu0 0.0
    %768 = vmatpush1.msra.mxu0 %v646
    %769 = vmatprep.subr.mxu0 0.0
    %770 = vmatpush1.msra.mxu0 %v649
    %771 = vmatprep.subr.mxu0 0.0
    %772 = vmatpush1.msra.mxu0 %v652
    %773 = vmatprep.subr.mxu0 0.0
    %774 = vmatpush1.msra.mxu0 0.0
    %775 = vmatprep.subr.mxu0 0.0
    %776 = vmatpush1.msra.mxu0 0.0
    %777 = vmatprep.subr.mxu0 0.0
    %778 = vmatpush1.msra.mxu0 0.0
    %779 = vmatprep.subr.mxu0 0.0
    %780 = vmatpush1.msra.mxu0 0.0
    %781 = vmatprep.subr.mxu0 0.0
    %782 = vmatpush1.msra.mxu0 0.0
    %783 = vmatprep.subr.mxu0 0.0
    %784 = vmatpush1.msra.mxu0 0.0
    %785 = vmatprep.subr.mxu0 0.0
    %786 = vmatpush1.msra.mxu0 0.0
    %787 = vmatprep.subr.mxu0 0.0
    %788 = vmatpush1.msra.mxu0 0.0
    %789 = vmatprep.subr.mxu0 0.0
    %790 = vmatpush1.msra.mxu0 0.0
    %791 = vmatprep.subr.mxu0 0.0
    %792 = vmatpush1.msra.mxu0 0.0
    %793 = vmatprep.subr.mxu0 0.0
    %794 = vmatpush1.msra.mxu0 0.0
    %795 = vmatprep.subr.mxu0 0.0
    %796 = vmatpush1.msra.mxu0 0.0
    %797 = vmatprep.subr.mxu0 0.0
    %798 = vmatpush1.msra.mxu0 0.0
    %799 = vmatprep.subr.mxu0 0.0
    %800 = vmatpush1.msra.mxu0 0.0
    %801 = vmatprep.subr.mxu0 0.0
    %802 = vmatpush1.msra.mxu0 0.0
    %803 = vmatprep.subr.mxu0 0.0
    %804 = vmatpush1.msra.mxu0 0.0
    %805 = vmatprep.mubr.f32.mxu0 0.0
    %806 = vmatmul.mubr.f32.gmra.mrb[0].mxu0 %v604
    %v807 = vpop.f32.mrb[0].mxu0
    %v808 = vadd.f32 %v666, %v807
    %v809 = vpop.f32.mrb[0].mxu0
    %810 = vdwg.mxu0
    %811 = vst [vmem:[#allocation14] sm:$0xff] %v737
    %812 = vst [vmem:[#allocation14 + $0x8] sm:$0xff] %v739
    %813 = vst [vmem:[#allocation14 + $0x10] sm:$0xff] %v808
    // Predicated region
    $region82: #{tpu_custom_call.1} parent=1 // pred_check
      _
    $region83: #{tpu_custom_call.1} parent=1 // pred_check_branch
      %815 = sbr.rel (0) target = $region85
    $region84: #{tpu_custom_call.1} parent=1 // pred_region
      %s817 = ssub.s32 384, 384
      %818 = vsyncadd [#allocation4], %s817
      %s820 = sshll.u32 [#allocation14], 4
      %s821 = int_to_ptr.vmem [resolvable:$true] %s820
      %823 = dma.vmem_to_hbm [thread:$0]  %s821, 384, %s13, [#allocation4]
    $region85: #{tpu_custom_call.1} parent=1 // pred_fallthru
      _
    // Predicated region
    $region86: #{tpu_custom_call.1} parent=1 // pred_check
      _
    $region87: #{tpu_custom_call.1} parent=1 // pred_check_branch
      %825 = sbr.rel (0) target = $region89
    $region88: #{tpu_custom_call.1} parent=1 // pred_region
      %826 = dma.done [#allocation4], 384
    $region89: #{tpu_custom_call.1} parent=1 // pred_fallthru
      _
    %827 = vsyncpa [#allocation3], 1
    %828 = vsyncpa [#allocation6], 1
    %829 = vsyncpa [#allocation9], 1
    %830 = vsyncpa [#allocation12], 1
    %831 = vsyncpa [#allocation4], 1

</llo_original>
